<compile_context>
chip_gen: v7x
topology: tpu7x:2x2x1
jax: 0.10.0
libtpu: 0.0.40
codegen_flags: <defaults>
</compile_context>

<pallas_src>
import functools

import jax
import jax.numpy as jnp
from jax.experimental import pallas as pl
from jax.experimental.pallas import tpu as pltpu


def _round_up(x, m):
    return ((x + m - 1) // m) * m


def _jodie_kernel(zs_ref, zd_ref, ws_ref, bs_ref, wd_ref, bd_ref,
                  wf_ref, sel_ref, bf_ref, o_ref):
    # Two (TILE_M, CP) @ (CP, CP) MXU matmuls with f32 accumulation on
    # block-diagonal packed weights; bias adds / product / ReLU are cheap VPU
    # filler underneath the streaming DMAs.
    h_src = jnp.dot(zs_ref[...], ws_ref[...],
                    preferred_element_type=jnp.float32) + bs_ref[...]
    h_dst = jnp.dot(zd_ref[...], wd_ref[...],
                    preferred_element_type=jnp.float32) + bd_ref[...]
    h = jnp.maximum(h_src * h_dst, 0.0)
    # Linear(C -> 1) per packed group of C lanes: VPU multiply + segment-sum
    # matmul against a 0/1 selector (one extra MXU push; the MXU has huge
    # slack in this memory-bound kernel).  b_final is read from SMEM.
    logit = jnp.dot(h * wf_ref[...], sel_ref[...],
                    preferred_element_type=jnp.float32) + bf_ref[0]
    o_ref[...] = jax.nn.sigmoid(logit).astype(o_ref.dtype)


@functools.partial(jax.jit,
                   static_argnames=("tile_n", "use_bf16", "act_buffers"))
def jodie_link_predictor(z_src, z_dst, params, *, tile_n=None, use_bf16=True,
                         act_buffers=None):
    """params: w_src (C,C), b_src (C,), w_dst (C,C), b_dst (C,), w_final (C,1),
    b_final (1,). Weights are stored pre-transposed to (in, out) layout."""
    n, c = z_src.shape
    out_dtype = z_src.dtype
    stream_dtype = jnp.bfloat16 if use_bf16 else jnp.float32

    # Pack the narrow feature dim into full 128-lane vregs when possible.
    p = 128 // c if (c < 128 and 128 % c == 0) else 1
    cp = c * p

    # Row-tile selection (rows of the original (N, C) problem).
    if tile_n is None:
        tile_n = 16384 if use_bf16 else 8192
    gran = max(128, 8 * p)                       # lane + sublane granularity
    tile_n = max(gran, (int(tile_n) // gran) * gran)
    # Keep >= 2 grid steps when N allows it so both v7x TensorCores issue DMAs.
    tile_n = min(tile_n, max(gran, _round_up((n + 1) // 2, gran)))
    n_pad = _round_up(n, tile_n)
    num_tiles = n_pad // tile_n
    tile_m = tile_n // p                         # packed rows per grid step

    # ---- wrapper-side prep: cast / pad / pack activations, build weights ----
    # TODO(synk): if the caller already holds z in bf16 (or produces it fused
    # upstream), pass it directly to avoid the extra convert pass.
    z_src = z_src.astype(stream_dtype)
    z_dst = z_dst.astype(stream_dtype)
    if n_pad != n:
        pad = ((0, n_pad - n), (0, 0))
        z_src = jnp.pad(z_src, pad)
        z_dst = jnp.pad(z_dst, pad)
    # Free row-major view: (N, C) -> (N/P, C*P).
    z_src = z_src.reshape(n_pad // p, cp)
    z_dst = z_dst.reshape(n_pad // p, cp)

    eye_p = jnp.eye(p, dtype=jnp.float32)
    w_src = jnp.kron(eye_p, params["w_src"].astype(jnp.float32)).astype(stream_dtype)
    w_dst = jnp.kron(eye_p, params["w_dst"].astype(jnp.float32)).astype(stream_dtype)
    b_src = jnp.tile(params["b_src"].astype(jnp.float32), p).reshape(1, cp)
    b_dst = jnp.tile(params["b_dst"].astype(jnp.float32), p).reshape(1, cp)
    w_fin = jnp.tile(params["w_final"].astype(jnp.float32).reshape(-1),
                     p).reshape(1, cp)
    sel = jnp.kron(eye_p, jnp.ones((c, 1), jnp.float32))      # (cp, p) selector
    b_fin = params["b_final"].astype(jnp.float32).reshape(1)  # SMEM scalar

    # ---- specs ---------------------------------------------------------------
    act_kwargs = {}
    if act_buffers is not None and act_buffers != 2:
        # v7x sweep knob: deeper pipelining of the streamed activations.
        act_kwargs["pipeline_mode"] = pl.Buffered(act_buffers)
    act_spec = pl.BlockSpec((tile_m, cp), lambda i: (i, 0), **act_kwargs)

    def _res(shape):                              # VMEM-resident across steps
        return pl.BlockSpec(shape, lambda i: (0,) * len(shape))

    smem_spec = pl.BlockSpec(memory_space=pltpu.MemorySpace.SMEM)

    # Explicit VMEM budget: double-buffered activations + output + weights.
    itemsize = jnp.dtype(stream_dtype).itemsize
    lane = lambda x: _round_up(x, 128)
    est = (2 * 2 * tile_m * lane(cp) * itemsize                      # z_src, z_dst
           + 2 * tile_m * lane(p) * jnp.dtype(out_dtype).itemsize    # output
           + 2 * lane(cp) * lane(cp) * itemsize                      # weights
           + 8 * 8 * lane(cp) * 4)                                   # biases/wf/sel
    vmem_limit = int(min(64 << 20, max(2 * est, 16 << 20)))

    out = pl.pallas_call(
        _jodie_kernel,
        out_shape=jax.ShapeDtypeStruct((n_pad // p, p), out_dtype),
        grid=(num_tiles,),
        in_specs=[act_spec, act_spec,
                  _res((cp, cp)), _res((1, cp)),
                  _res((cp, cp)), _res((1, cp)),
                  _res((1, cp)), _res((cp, p)),
                  smem_spec],
        out_specs=pl.BlockSpec((tile_m, p), lambda i: (i, 0)),
        compiler_params=pltpu.CompilerParams(
            dimension_semantics=("parallel",),
            vmem_limit_bytes=vmem_limit),
    )(z_src, z_dst, w_src, b_src, w_dst, b_dst, w_fin, sel, b_fin)

    # Row-major flatten restores original row order: packed (R, g) -> row R*P+g.
    return out.reshape(n_pad)[:n].reshape(n, 1)


def init_params(key, in_channels):
    """Deterministic synthetic init (uniform, PyTorch-Linear-like bounds)."""
    ks = jax.random.split(key, 6)
    bound = 1.0 / jnp.sqrt(in_channels)
    # Stored pre-transposed as (in, out).
    w_src = jax.random.uniform(ks[0], (in_channels, in_channels),
                               jnp.float32, -bound, bound)
    b_src = jax.random.uniform(ks[1], (in_channels,), jnp.float32, -bound, bound)
    w_dst = jax.random.uniform(ks[2], (in_channels, in_channels),
                               jnp.float32, -bound, bound)
    b_dst = jax.random.uniform(ks[3], (in_channels,), jnp.float32, -bound, bound)
    w_fin = jax.random.uniform(ks[4], (in_channels, 1),
                               jnp.float32, -bound, bound)
    b_fin = jax.random.uniform(ks[5], (1,), jnp.float32, -bound, bound)
    return dict(w_src=w_src, b_src=b_src,
                w_dst=w_dst, b_dst=b_dst,
                w_final=w_fin, b_final=b_fin)


def reference(z_src, z_dst, prm):
    h = (z_src @ prm["w_src"] + prm["b_src"]) * (z_dst @ prm["w_dst"] + prm["b_dst"])
    h = jnp.maximum(h, 0.0)
    return jax.nn.sigmoid(h @ prm["w_final"] + prm["b_final"])


if __name__ == "__main__":
    key = jax.random.PRNGKey(0)
    k_par, k1, k2, k3, k4 = jax.random.split(key, 5)

    C = 32
    params = init_params(k_par, C)

    # Case 1: tiny batch, f32 streaming path (tight tolerance).
    N1 = 8
    zs1 = jax.random.normal(k1, (N1, C), jnp.float32)
    zd1 = jax.random.normal(k2, (N1, C), jnp.float32)
    out1 = jax.block_until_ready(
        jodie_link_predictor(zs1, zd1, params, use_bf16=False))
    ref1 = reference(zs1, zd1, params)
    assert out1.shape == (N1, 1)
    assert jnp.allclose(out1, ref1, atol=2e-4, rtol=2e-4)

    # Case 2: multi-tile grid with a ragged last tile, f32 streaming.
    N2 = 300
    zs2 = jax.random.normal(k3, (N2, C), jnp.float32)
    zd2 = jax.random.normal(k4, (N2, C), jnp.float32)
    out2 = jax.block_until_ready(
        jodie_link_predictor(zs2, zd2, params, tile_n=128, use_bf16=False))
    ref2 = reference(zs2, zd2, params)
    assert out2.shape == (N2, 1)
    assert jnp.allclose(out2, ref2, atol=2e-4, rtol=2e-4)

    # Case 3: default fast path (bf16 streaming, auto tile, >=2 grid steps).
    out3 = jax.block_until_ready(jodie_link_predictor(zs2, zd2, params))
    assert out3.shape == (N2, 1)
    assert jnp.allclose(out3, ref2, atol=2e-2, rtol=2e-2)

    print("KERNEL_OK")
</pallas_src>

<mosaic_0001>
module attributes {stable_mosaic.version = 11 : i64} {
  func.func @_jodie_kernel(%arg0: i32, %arg1: memref<32x128xf32, #tpu.memory_space<vmem>>, %arg2: memref<32x128xf32, #tpu.memory_space<vmem>>, %arg3: memref<128x128xf32, #tpu.memory_space<vmem>>, %arg4: memref<1x128xf32, #tpu.memory_space<vmem>>, %arg5: memref<128x128xf32, #tpu.memory_space<vmem>>, %arg6: memref<1x128xf32, #tpu.memory_space<vmem>>, %arg7: memref<1x128xf32, #tpu.memory_space<vmem>>, %arg8: memref<128x4xf32, #tpu.memory_space<vmem>>, %arg9: memref<1xf32, #tpu.memory_space<smem>>, %arg10: memref<32x4xf32, #tpu.memory_space<vmem>>) attributes {dimension_semantics = [#tpu.dimension_semantics<parallel>], iteration_bounds = array<i64: 1>, scalar_prefetch = 0 : i64, scratch_operands = 0 : i64, tpu.core_type = #tpu.core_type<tc>, window_params = [{transform_indices = @transform_0, window_bounds = array<i64: 32, 128>}, {transform_indices = @transform_1, window_bounds = array<i64: 32, 128>}, {pipeline_mode = #tpu.pipeline_mode<synchronous>, transform_indices = @transform_2, window_bounds = array<i64: 128, 128>}, {pipeline_mode = #tpu.pipeline_mode<synchronous>, transform_indices = @transform_3, window_bounds = array<i64: 1, 128>}, {pipeline_mode = #tpu.pipeline_mode<synchronous>, transform_indices = @transform_4, window_bounds = array<i64: 128, 128>}, {pipeline_mode = #tpu.pipeline_mode<synchronous>, transform_indices = @transform_5, window_bounds = array<i64: 1, 128>}, {pipeline_mode = #tpu.pipeline_mode<synchronous>, transform_indices = @transform_6, window_bounds = array<i64: 1, 128>}, {pipeline_mode = #tpu.pipeline_mode<synchronous>, transform_indices = @transform_7, window_bounds = array<i64: 128, 4>}, {transform_indices = @transform_8, window_bounds = array<i64: 1>}, {transform_indices = @transform_9, window_bounds = array<i64: 32, 4>}]} {
    %c0 = arith.constant 0 : index
    %c0_0 = arith.constant 0 : index
    %0 = vector.load %arg1[%c0, %c0_0] : memref<32x128xf32, #tpu.memory_space<vmem>>, vector<32x128xf32>
    %c0_1 = arith.constant 0 : index
    %c0_2 = arith.constant 0 : index
    %1 = vector.load %arg3[%c0_1, %c0_2] : memref<128x128xf32, #tpu.memory_space<vmem>>, vector<128x128xf32>
    %cst = arith.constant dense<0.000000e+00> : vector<32x128xf32>
    %2 = tpu.matmul %0, %1, %cst {dimension_numbers = #tpu.dot_dimension_numbers<[1], [0], [0], [1], [0, 0, 1, 1], [], []>} : vector<32x128xf32>, vector<128x128xf32>, vector<32x128xf32> -> vector<32x128xf32>
    %c0_3 = arith.constant 0 : index
    %c0_4 = arith.constant 0 : index
    %3 = vector.load %arg4[%c0_3, %c0_4] : memref<1x128xf32, #tpu.memory_space<vmem>>, vector<1x128xf32>
    %4 = vector.broadcast %3 : vector<1x128xf32> to vector<32x128xf32>
    %5 = arith.addf %2, %4 : vector<32x128xf32>
    %c0_5 = arith.constant 0 : index
    %c0_6 = arith.constant 0 : index
    %6 = vector.load %arg2[%c0_5, %c0_6] : memref<32x128xf32, #tpu.memory_space<vmem>>, vector<32x128xf32>
    %c0_7 = arith.constant 0 : index
    %c0_8 = arith.constant 0 : index
    %7 = vector.load %arg5[%c0_7, %c0_8] : memref<128x128xf32, #tpu.memory_space<vmem>>, vector<128x128xf32>
    %cst_9 = arith.constant dense<0.000000e+00> : vector<32x128xf32>
    %8 = tpu.matmul %6, %7, %cst_9 {dimension_numbers = #tpu.dot_dimension_numbers<[1], [0], [0], [1], [0, 0, 1, 1], [], []>} : vector<32x128xf32>, vector<128x128xf32>, vector<32x128xf32> -> vector<32x128xf32>
    %c0_10 = arith.constant 0 : index
    %c0_11 = arith.constant 0 : index
    %9 = vector.load %arg6[%c0_10, %c0_11] : memref<1x128xf32, #tpu.memory_space<vmem>>, vector<1x128xf32>
    %10 = vector.broadcast %9 : vector<1x128xf32> to vector<32x128xf32>
    %11 = arith.addf %8, %10 : vector<32x128xf32>
    %12 = arith.mulf %5, %11 : vector<32x128xf32>
    %cst_12 = arith.constant 0.000000e+00 : f32
    %13 = vector.broadcast %cst_12 : f32 to vector<32x128xf32>
    %14 = arith.maximumf %12, %13 : vector<32x128xf32>
    %c0_13 = arith.constant 0 : index
    %c0_14 = arith.constant 0 : index
    %15 = vector.load %arg7[%c0_13, %c0_14] : memref<1x128xf32, #tpu.memory_space<vmem>>, vector<1x128xf32>
    %16 = vector.broadcast %15 : vector<1x128xf32> to vector<32x128xf32>
    %17 = arith.mulf %14, %16 : vector<32x128xf32>
    %c0_15 = arith.constant 0 : index
    %c0_16 = arith.constant 0 : index
    %18 = vector.load %arg8[%c0_15, %c0_16] : memref<128x4xf32, #tpu.memory_space<vmem>>, vector<128x4xf32>
    %cst_17 = arith.constant dense<0.000000e+00> : vector<32x4xf32>
    %19 = tpu.matmul %17, %18, %cst_17 {dimension_numbers = #tpu.dot_dimension_numbers<[1], [0], [0], [1], [0, 0, 1, 1], [], []>} : vector<32x128xf32>, vector<128x4xf32>, vector<32x4xf32> -> vector<32x4xf32>
    %c0_18 = arith.constant 0 : index
    %20 = memref.load %arg9[%c0_18] : memref<1xf32, #tpu.memory_space<smem>>
    %21 = vector.broadcast %20 : f32 to vector<32x4xf32>
    %22 = arith.addf %19, %21 : vector<32x4xf32>
    %23 = arith.negf %22 : vector<32x4xf32>
    %24 = math.exp %23 : vector<32x4xf32>
    %cst_19 = arith.constant 1.000000e+00 : f32
    %25 = vector.broadcast %cst_19 : f32 to vector<32x4xf32>
    %26 = arith.addf %25, %24 : vector<32x4xf32>
    %27 = arith.divf %25, %26 : vector<32x4xf32>
    %c0_20 = arith.constant 0 : index
    %c0_21 = arith.constant 0 : index
    %28 = vector.load %arg10[%c0_20, %c0_21] : memref<32x4xf32, #tpu.memory_space<vmem>>, vector<32x4xf32>
    tpu.vector_store %arg10[%c0_20, %c0_21], %27 {strides = array<i32>} : memref<32x4xf32, #tpu.memory_space<vmem>>, vector<32x4xf32>,
    return
  }
  func.func @transform_0(%arg0: i32) -> (i32, i32) {
    %c0_i32 = arith.constant 0 : i32
    %c0_i32_0 = arith.constant 0 : i32
    return %arg0, %c0_i32 : i32, i32
  }
  func.func @transform_1(%arg0: i32) -> (i32, i32) {
    %c0_i32 = arith.constant 0 : i32
    %c0_i32_0 = arith.constant 0 : i32
    return %arg0, %c0_i32 : i32, i32
  }
  func.func @transform_2(%arg0: i32) -> (i32, i32) {
    %c0_i32 = arith.constant 0 : i32
    %c0_i32_0 = arith.constant 0 : i32
    %c0_i32_1 = arith.constant 0 : i32
    return %c0_i32, %c0_i32_0 : i32, i32
  }
  func.func @transform_3(%arg0: i32) -> (i32, i32) {
    %c0_i32 = arith.constant 0 : i32
    %c0_i32_0 = arith.constant 0 : i32
    %c0_i32_1 = arith.constant 0 : i32
    return %c0_i32, %c0_i32_0 : i32, i32
  }
  func.func @transform_4(%arg0: i32) -> (i32, i32) {
    %c0_i32 = arith.constant 0 : i32
    %c0_i32_0 = arith.constant 0 : i32
    %c0_i32_1 = arith.constant 0 : i32
    return %c0_i32, %c0_i32_0 : i32, i32
  }
  func.func @transform_5(%arg0: i32) -> (i32, i32) {
    %c0_i32 = arith.constant 0 : i32
    %c0_i32_0 = arith.constant 0 : i32
    %c0_i32_1 = arith.constant 0 : i32
    return %c0_i32, %c0_i32_0 : i32, i32
  }
  func.func @transform_6(%arg0: i32) -> (i32, i32) {
    %c0_i32 = arith.constant 0 : i32
    %c0_i32_0 = arith.constant 0 : i32
    %c0_i32_1 = arith.constant 0 : i32
    return %c0_i32, %c0_i32_0 : i32, i32
  }
  func.func @transform_7(%arg0: i32) -> (i32, i32) {
    %c0_i32 = arith.constant 0 : i32
    %c0_i32_0 = arith.constant 0 : i32
    %c0_i32_1 = arith.constant 0 : i32
    return %c0_i32, %c0_i32_0 : i32, i32
  }
  func.func @transform_8(%arg0: i32) -> i32 {
    %c0_i32 = arith.constant 0 : i32
    %c0_i32_0 = arith.constant 0 : i32
    return %c0_i32 : i32
  }
  func.func @transform_9(%arg0: i32) -> (i32, i32) {
    %c0_i32 = arith.constant 0 : i32
    %c0_i32_0 = arith.constant 0 : i32
    return %arg0, %c0_i32 : i32, i32
  }
}

</mosaic_0001>

<llo_original>
// kernel: tile.17
$region0: #{tile.17}
  #allocation0 [shape = 's32[1]{0}', space=sflag, size = 0x4, scoped, tag = 'scoped memory for tile.17']
  %s0 = inlined_call_operand.vmem [shape: f32[32], index: 0, kind: input, shape index: {}]
  %s1 = inlined_call_operand.vmem [shape: f32[4,32], index: 1, kind: output, shape index: {}]
  // Predicated region
  $region2: #{tile.17} parent=0 // pred_check
    _
  $region3: #{tile.17} parent=0 // pred_check_branch
    %3 = sbr.rel (0) target = $region5
  $region4: #{tile.17} parent=0 // pred_region
    _
  $region5: #{tile.17} parent=0 // pred_fallthru
    _
  %v4 = vld [vmem:[%s0] ss:$0 sm:$0xff]
  %5 = vst [vmem:[%s1] sm:$0xf] %v4

// kernel: tile.18
$region0: #{tile.18}
  %s0 = inlined_call_operand.vmem [shape: f32[4,32], index: 0, kind: input, shape index: {}]
  %s1 = inlined_call_operand.vmem [shape: f32[1,128], index: 1, kind: output, shape index: {}]
  $region1: #{tile.18} parent=0
    #allocation0 [shape = 'u8[4096]{0}', space=vmem, size = 0x1000, scoped, tag = 'scoped mem for output reshape']
    #allocation1 [shape = 'u8[4096]{0}', space=vmem, size = 0x1000, scoped, tag = 'scoped mem for input reshape']
    %s3 = sshllo.u32 0, 4
    %v4 = vld [vmem:[%s0] sm:%s3]
    %5 = vst [vmem:[#allocation1] sm:%s3] %v4
    %v6 = vld [vmem:[#allocation1] sm:$0x1]
    %vm7 = vcmask 261120
    %8 = vst.msk [vmem:[#allocation0] sm:$0x1] %vm7, %v6
    %s9 = scalar_lea.vmem [#allocation1], 3
    %v10 = vld [vmem:[%s9] sm:$0x1]
    %11 = vrot.lane.b32.xlu0 %v10, 96
    %v12 = vpop.permute.xlu0 %11
    %vm13 = vcmask 1048320
    %14 = vst.msk [vmem:[#allocation0] sm:$0x1] %vm13, %v12
    %s15 = scalar_lea.vmem [#allocation1], 2
    %v16 = vld [vmem:[%s15] sm:$0x1]
    %17 = vrot.lane.b32.xlu0 %v16, 64
    %v18 = vpop.permute.xlu0 %17
    %vm19 = vcmask 785920
    %20 = vst.msk [vmem:[#allocation0] sm:$0x1] %vm19, %v18
    %s21 = scalar_lea.vmem [#allocation1], 1
    %v22 = vld [vmem:[%s21] sm:$0x1]
    %23 = vrot.lane.b32.xlu0 %v22, 32
    %v24 = vpop.permute.xlu0 %23
    %vm25 = vcmask 523520
    %26 = vst.msk [vmem:[#allocation0] sm:$0x1] %vm25, %v24
    %s28 = sshllo.u32 0, 1
    %v30 = vld [vmem:[#allocation0] sm:%s28]
    %s31 = sshllo.u32 0, 1
    %32 = vst [vmem:[%s1] sm:%s31] %v30

// kernel: jodie_link_predictor.1
$region0: #{jodie_link_predictor.1}
  #allocation0 [shape = 'u32[]', space=smem, size = 0x4, offset = 0x4, fixed_abs, tag = 'smem constant byte address 0x4 - core index']
  #allocation1 [shape = 'u32[144,128]{1,0:T(1,128)}', space=vmem, size = 0x12000, scoped, tag = 'internal scratch']
  #allocation2 [shape = 'f32[1]{0:T(128)S(6)}', space=smem, size = 0x200, scoped, tag = 'scoped memory for jodie_link_predictor.1']
  %s0 = inlined_call_operand.vmem [shape: f32[32,128], index: 0, kind: input, shape index: {}]
  %s1 = inlined_call_operand.vmem [shape: f32[32,128], index: 1, kind: input, shape index: {}]
  %s2 = inlined_call_operand.vmem [shape: f32[128,128], index: 2, kind: input, shape index: {}]
  %s3 = inlined_call_operand.vmem [shape: f32[1,128], index: 3, kind: input, shape index: {}]
  %s4 = inlined_call_operand.vmem [shape: f32[128,128], index: 4, kind: input, shape index: {}]
  %s5 = inlined_call_operand.vmem [shape: f32[1,128], index: 5, kind: input, shape index: {}]
  %s6 = inlined_call_operand.vmem [shape: f32[1,128], index: 6, kind: input, shape index: {}]
  %s7 = inlined_call_operand.vmem [shape: f32[128,4], index: 7, kind: input, shape index: {}]
  %s8 = inlined_call_operand.<no memory space> [shape: f32[1], index: 8, kind: input, shape index: {}]
  %s9 = inlined_call_operand.vmem [shape: f32[32,4], index: 9, kind: output, shape index: {}]
  %s10 = sld [smem:[#allocation0]]
  $region46: #{jodie_link_predictor.1} parent=0
    _
  %s12 = ssub.s32 1, %s10
  %s13 = scalar_select 0, %s12, %s10
  %14 = sst [smem:[#allocation2]] %s8
  // Predicated region
  $region2: #{jodie_link_predictor.1} parent=0 // pred_check
    _
  $region3: #{jodie_link_predictor.1} parent=0 // pred_check_branch
    %16 = sbr.rel (0) target = $region5
  $region4: #{jodie_link_predictor.1} parent=0 // pred_region
    _
  $region5: #{jodie_link_predictor.1} parent=0 // pred_fallthru
    _
  // Predicated region
  $region6: #{jodie_link_predictor.1} parent=0 // pred_check
    _
  $region7: #{jodie_link_predictor.1} parent=0 // pred_check_branch
    %18 = sbr.rel (0) target = $region9
  $region8: #{jodie_link_predictor.1} parent=0 // pred_region
    _
  $region9: #{jodie_link_predictor.1} parent=0 // pred_fallthru
    _
  // Predicated region
  $region10: #{jodie_link_predictor.1} parent=0 // pred_check
    _
  $region11: #{jodie_link_predictor.1} parent=0 // pred_check_branch
    %20 = sbr.rel (0) target = $region13
  $region12: #{jodie_link_predictor.1} parent=0 // pred_region
    _
  $region13: #{jodie_link_predictor.1} parent=0 // pred_fallthru
    _
  // Predicated region
  $region14: #{jodie_link_predictor.1} parent=0 // pred_check
    _
  $region15: #{jodie_link_predictor.1} parent=0 // pred_check_branch
    %22 = sbr.rel (0) target = $region17
  $region16: #{jodie_link_predictor.1} parent=0 // pred_region
    _
  $region17: #{jodie_link_predictor.1} parent=0 // pred_fallthru
    _
  // Predicated region
  $region18: #{jodie_link_predictor.1} parent=0 // pred_check
    _
  $region19: #{jodie_link_predictor.1} parent=0 // pred_check_branch
    %24 = sbr.rel (0) target = $region21
  $region20: #{jodie_link_predictor.1} parent=0 // pred_region
    _
  $region21: #{jodie_link_predictor.1} parent=0 // pred_fallthru
    _
  // Predicated region
  $region22: #{jodie_link_predictor.1} parent=0 // pred_check
    _
  $region23: #{jodie_link_predictor.1} parent=0 // pred_check_branch
    %26 = sbr.rel (0) target = $region25
  $region24: #{jodie_link_predictor.1} parent=0 // pred_region
    _
  $region25: #{jodie_link_predictor.1} parent=0 // pred_fallthru
    _
  // Predicated region
  $region26: #{jodie_link_predictor.1} parent=0 // pred_check
    _
  $region27: #{jodie_link_predictor.1} parent=0 // pred_check_branch
    %28 = sbr.rel (0) target = $region29
  $region28: #{jodie_link_predictor.1} parent=0 // pred_region
    _
  $region29: #{jodie_link_predictor.1} parent=0 // pred_fallthru
    _
  // Predicated region
  $region30: #{jodie_link_predictor.1} parent=0 // pred_check
    _
  $region31: #{jodie_link_predictor.1} parent=0 // pred_check_branch
    %30 = sbr.rel (0) target = $region33
  $region32: #{jodie_link_predictor.1} parent=0 // pred_region
    _
  $region33: #{jodie_link_predictor.1} parent=0 // pred_fallthru
    _
  // Predicated region
  $region34: #{jodie_link_predictor.1} parent=0 // pred_check
    _
  $region35: #{jodie_link_predictor.1} parent=0 // pred_check_branch
    %32 = sbr.rel (0) target = $region37
  $region36: #{jodie_link_predictor.1} parent=0 // pred_region
    _
  $region37: #{jodie_link_predictor.1} parent=0 // pred_fallthru
    _
  %v33 = vld [vmem:[%s0] sm:$0xff]
  %v34 = vld [vmem:[%s0 + $0x8] sm:$0xff]
  %v35 = vld [vmem:[%s0 + $0x10] sm:$0xff]
  %v36 = vld [vmem:[%s0 + $0x18] sm:$0xff]
  %v37 = vld [vmem:[%s2] sm:$0xff]
  %v38 = vld [vmem:[%s2 + $0x8] sm:$0xff]
  %v39 = vld [vmem:[%s2 + $0x10] sm:$0xff]
  %v40 = vld [vmem:[%s2 + $0x18] sm:$0xff]
  %v41 = vld [vmem:[%s2 + $0x20] sm:$0xff]
  %v42 = vld [vmem:[%s2 + $0x28] sm:$0xff]
  %v43 = vld [vmem:[%s2 + $0x30] sm:$0xff]
  %v44 = vld [vmem:[%s2 + $0x38] sm:$0xff]
  %v45 = vld [vmem:[%s2 + $0x40] sm:$0xff]
  %v46 = vld [vmem:[%s2 + $0x48] sm:$0xff]
  %v47 = vld [vmem:[%s2 + $0x50] sm:$0xff]
  %v48 = vld [vmem:[%s2 + $0x58] sm:$0xff]
  %v49 = vld [vmem:[%s2 + $0x60] sm:$0xff]
  %v50 = vld [vmem:[%s2 + $0x68] sm:$0xff]
  %v51 = vld [vmem:[%s2 + $0x70] sm:$0xff]
  %v52 = vld [vmem:[%s2 + $0x78] sm:$0xff]
  %v53 = vld [vmem:[%s3] sm:$0x1]
  %v55 = vlaneseq
  %v56 = vshrl.u32 %v55, 7
  %v57 = vsub.s32 0, %v56
  %v58 = vrot.slane %v53, %v57
  %60 = vmatprep.subr.mxu0 0.0
  %61 = vmatpush1.msra.mxu0 %v37
  %62 = vmatprep.subr.mxu0 0.0
  %63 = vmatpush1.msra.mxu0 %v38
  %64 = vmatprep.subr.mxu0 0.0
  %65 = vmatpush1.msra.mxu0 %v39
  %66 = vmatprep.subr.mxu0 0.0
  %67 = vmatpush1.msra.mxu0 %v40
  %68 = vmatprep.subr.mxu0 0.0
  %69 = vmatpush1.msra.mxu0 %v41
  %70 = vmatprep.subr.mxu0 0.0
  %71 = vmatpush1.msra.mxu0 %v42
  %72 = vmatprep.subr.mxu0 0.0
  %73 = vmatpush1.msra.mxu0 %v43
  %74 = vmatprep.subr.mxu0 0.0
  %75 = vmatpush1.msra.mxu0 %v44
  %76 = vmatprep.subr.mxu0 0.0
  %77 = vmatpush1.msra.mxu0 %v45
  %78 = vmatprep.subr.mxu0 0.0
  %79 = vmatpush1.msra.mxu0 %v46
  %80 = vmatprep.subr.mxu0 0.0
  %81 = vmatpush1.msra.mxu0 %v47
  %82 = vmatprep.subr.mxu0 0.0
  %83 = vmatpush1.msra.mxu0 %v48
  %84 = vmatprep.subr.mxu0 0.0
  %85 = vmatpush1.msra.mxu0 %v49
  %86 = vmatprep.subr.mxu0 0.0
  %87 = vmatpush1.msra.mxu0 %v50
  %88 = vmatprep.subr.mxu0 0.0
  %89 = vmatpush1.msra.mxu0 %v51
  %90 = vmatprep.subr.mxu0 0.0
  %91 = vmatpush1.msra.mxu0 %v52
  %92 = vmatprep.subr.mxu0 0.0
  %93 = vmatpush1.msra.mxu0 0.0
  %94 = vmatprep.subr.mxu0 0.0
  %95 = vmatpush1.msra.mxu0 0.0
  %96 = vmatprep.subr.mxu0 0.0
  %97 = vmatpush1.msra.mxu0 0.0
  %98 = vmatprep.subr.mxu0 0.0
  %99 = vmatpush1.msra.mxu0 0.0
  %100 = vmatprep.subr.mxu0 0.0
  %101 = vmatpush1.msra.mxu0 0.0
  %102 = vmatprep.subr.mxu0 0.0
  %103 = vmatpush1.msra.mxu0 0.0
  %104 = vmatprep.subr.mxu0 0.0
  %105 = vmatpush1.msra.mxu0 0.0
  %106 = vmatprep.subr.mxu0 0.0
  %107 = vmatpush1.msra.mxu0 0.0
  %108 = vmatprep.subr.mxu0 0.0
  %109 = vmatpush1.msra.mxu0 0.0
  %110 = vmatprep.subr.mxu0 0.0
  %111 = vmatpush1.msra.mxu0 0.0
  %112 = vmatprep.subr.mxu0 0.0
  %113 = vmatpush1.msra.mxu0 0.0
  %114 = vmatprep.subr.mxu0 0.0
  %115 = vmatpush1.msra.mxu0 0.0
  %116 = vmatprep.subr.mxu0 0.0
  %117 = vmatpush1.msra.mxu0 0.0
  %118 = vmatprep.subr.mxu0 0.0
  %119 = vmatpush1.msra.mxu0 0.0
  %120 = vmatprep.subr.mxu0 0.0
  %121 = vmatpush1.msra.mxu0 0.0
  %122 = vmatprep.subr.mxu0 0.0
  %123 = vmatpush1.msra.mxu0 0.0
  %124 = vmatprep.mubr.f32.mxu0 0.0
  %125 = vmatmul.mubr.f32.gmra.mrb[0].mxu0 %v33
  %v126 = vpop.f32.mrb[0].mxu0
  %v127 = vadd.f32 %v58, %v126
  %v128 = vpop.f32.mrb[0].mxu0
  %129 = vmatprep.mubr.f32.mxu0 0.0
  %130 = vmatmul.mubr.f32.gmra.mrb[0].mxu0 %v34
  %v131 = vpop.f32.mrb[0].mxu0
  %v132 = vadd.f32 %v58, %v131
  %v133 = vpop.f32.mrb[0].mxu0
  %134 = vmatprep.mubr.f32.mxu0 0.0
  %135 = vmatmul.mubr.f32.gmra.mrb[0].mxu0 %v35
  %v136 = vpop.f32.mrb[0].mxu0
  %v137 = vadd.f32 %v58, %v136
  %v138 = vpop.f32.mrb[0].mxu0
  %139 = vmatprep.mubr.f32.mxu0 0.0
  %140 = vmatmul.mubr.f32.gmra.mrb[0].mxu0 %v36
  %v141 = vpop.f32.mrb[0].mxu0
  %v142 = vadd.f32 %v58, %v141
  %v143 = vpop.f32.mrb[0].mxu0
  %144 = vdwg.mxu0
  %v145 = vld [vmem:[%s1] sm:$0xff]
  %v146 = vld [vmem:[%s1 + $0x8] sm:$0xff]
  %v147 = vld [vmem:[%s1 + $0x10] sm:$0xff]
  %v148 = vld [vmem:[%s1 + $0x18] sm:$0xff]
  %v149 = vld [vmem:[%s4] sm:$0xff]
  %v150 = vld [vmem:[%s4 + $0x8] sm:$0xff]
  %v151 = vld [vmem:[%s4 + $0x10] sm:$0xff]
  %v152 = vld [vmem:[%s4 + $0x18] sm:$0xff]
  %v153 = vld [vmem:[%s4 + $0x20] sm:$0xff]
  %v154 = vld [vmem:[%s4 + $0x28] sm:$0xff]
  %v155 = vld [vmem:[%s4 + $0x30] sm:$0xff]
  %v156 = vld [vmem:[%s4 + $0x38] sm:$0xff]
  %v157 = vld [vmem:[%s4 + $0x40] sm:$0xff]
  %v158 = vld [vmem:[%s4 + $0x48] sm:$0xff]
  %v159 = vld [vmem:[%s4 + $0x50] sm:$0xff]
  %v160 = vld [vmem:[%s4 + $0x58] sm:$0xff]
  %v161 = vld [vmem:[%s4 + $0x60] sm:$0xff]
  %v162 = vld [vmem:[%s4 + $0x68] sm:$0xff]
  %v163 = vld [vmem:[%s4 + $0x70] sm:$0xff]
  %v164 = vld [vmem:[%s4 + $0x78] sm:$0xff]
  %v165 = vld [vmem:[%s5] sm:$0x1]
  %v167 = vlaneseq
  %v168 = vshrl.u32 %v167, 7
  %v169 = vsub.s32 0, %v168
  %v170 = vrot.slane %v165, %v169
  %172 = vmatprep.subr.mxu0 0.0
  %173 = vmatpush1.msra.mxu0 %v149
  %174 = vmatprep.subr.mxu0 0.0
  %175 = vmatpush1.msra.mxu0 %v150
  %176 = vmatprep.subr.mxu0 0.0
  %177 = vmatpush1.msra.mxu0 %v151
  %178 = vmatprep.subr.mxu0 0.0
  %179 = vmatpush1.msra.mxu0 %v152
  %180 = vmatprep.subr.mxu0 0.0
  %181 = vmatpush1.msra.mxu0 %v153
  %182 = vmatprep.subr.mxu0 0.0
  %183 = vmatpush1.msra.mxu0 %v154
  %184 = vmatprep.subr.mxu0 0.0
  %185 = vmatpush1.msra.mxu0 %v155
  %186 = vmatprep.subr.mxu0 0.0
  %187 = vmatpush1.msra.mxu0 %v156
  %188 = vmatprep.subr.mxu0 0.0
  %189 = vmatpush1.msra.mxu0 %v157
  %190 = vmatprep.subr.mxu0 0.0
  %191 = vmatpush1.msra.mxu0 %v158
  %192 = vmatprep.subr.mxu0 0.0
  %193 = vmatpush1.msra.mxu0 %v159
  %194 = vmatprep.subr.mxu0 0.0
  %195 = vmatpush1.msra.mxu0 %v160
  %196 = vmatprep.subr.mxu0 0.0
  %197 = vmatpush1.msra.mxu0 %v161
  %198 = vmatprep.subr.mxu0 0.0
  %199 = vmatpush1.msra.mxu0 %v162
  %200 = vmatprep.subr.mxu0 0.0
  %201 = vmatpush1.msra.mxu0 %v163
  %202 = vmatprep.subr.mxu0 0.0
  %203 = vmatpush1.msra.mxu0 %v164
  %204 = vmatprep.subr.mxu0 0.0
  %205 = vmatpush1.msra.mxu0 0.0
  %206 = vmatprep.subr.mxu0 0.0
  %207 = vmatpush1.msra.mxu0 0.0
  %208 = vmatprep.subr.mxu0 0.0
  %209 = vmatpush1.msra.mxu0 0.0
  %210 = vmatprep.subr.mxu0 0.0
  %211 = vmatpush1.msra.mxu0 0.0
  %212 = vmatprep.subr.mxu0 0.0
  %213 = vmatpush1.msra.mxu0 0.0
  %214 = vmatprep.subr.mxu0 0.0
  %215 = vmatpush1.msra.mxu0 0.0
  %216 = vmatprep.subr.mxu0 0.0
  %217 = vmatpush1.msra.mxu0 0.0
  %218 = vmatprep.subr.mxu0 0.0
  %219 = vmatpush1.msra.mxu0 0.0
  %220 = vmatprep.subr.mxu0 0.0
  %221 = vmatpush1.msra.mxu0 0.0
  %222 = vmatprep.subr.mxu0 0.0
  %223 = vmatpush1.msra.mxu0 0.0
  %224 = vmatprep.subr.mxu0 0.0
  %225 = vmatpush1.msra.mxu0 0.0
  %226 = vmatprep.subr.mxu0 0.0
  %227 = vmatpush1.msra.mxu0 0.0
  %228 = vmatprep.subr.mxu0 0.0
  %229 = vmatpush1.msra.mxu0 0.0
  %230 = vmatprep.subr.mxu0 0.0
  %231 = vmatpush1.msra.mxu0 0.0
  %232 = vmatprep.subr.mxu0 0.0
  %233 = vmatpush1.msra.mxu0 0.0
  %234 = vmatprep.subr.mxu0 0.0
  %235 = vmatpush1.msra.mxu0 0.0
  %236 = vmatprep.mubr.f32.mxu0 0.0
  %237 = vmatmul.mubr.f32.gmra.mrb[0].mxu0 %v145
  %v238 = vpop.f32.mrb[0].mxu0
  %v239 = vadd.f32 %v170, %v238
  %v240 = vpop.f32.mrb[0].mxu0
  %241 = vmatprep.mubr.f32.mxu0 0.0
  %242 = vmatmul.mubr.f32.gmra.mrb[0].mxu0 %v146
  %v243 = vpop.f32.mrb[0].mxu0
  %v244 = vadd.f32 %v170, %v243
  %v245 = vpop.f32.mrb[0].mxu0
  %246 = vmatprep.mubr.f32.mxu0 0.0
  %247 = vmatmul.mubr.f32.gmra.mrb[0].mxu0 %v147
  %v248 = vpop.f32.mrb[0].mxu0
  %v249 = vadd.f32 %v170, %v248
  %v250 = vpop.f32.mrb[0].mxu0
  %251 = vmatprep.mubr.f32.mxu0 0.0
  %252 = vmatmul.mubr.f32.gmra.mrb[0].mxu0 %v148
  %v253 = vpop.f32.mrb[0].mxu0
  %v254 = vadd.f32 %v170, %v253
  %v255 = vpop.f32.mrb[0].mxu0
  %256 = vdwg.mxu0
  %v257 = vmul.f32 %v127, %v239
  %v258 = vmul.f32 %v132, %v244
  %v259 = vmul.f32 %v137, %v249
  %v260 = vmul.f32 %v142, %v254
  %v261 = vmax.f32 %v257, 0.0
  %v262 = vmax.f32 %v258, 0.0
  %v263 = vmax.f32 %v259, 0.0
  %v264 = vmax.f32 %v260, 0.0
  %v265 = vld [vmem:[%s6] sm:$0x1]
  %v267 = vlaneseq
  %v268 = vshrl.u32 %v267, 7
  %v269 = vsub.s32 0, %v268
  %v270 = vrot.slane %v265, %v269
  %v272 = vmul.f32 %v261, %v270
  %v273 = vmul.f32 %v262, %v270
  %v274 = vmul.f32 %v263, %v270
  %v275 = vmul.f32 %v264, %v270
  %v276 = vld [vmem:[%s7] sm:$0xff]
  %v277 = vld [vmem:[%s7 + $0x8] sm:$0xff]
  %v278 = vld [vmem:[%s7 + $0x10] sm:$0xff]
  %v279 = vld [vmem:[%s7 + $0x18] sm:$0xff]
  %v280 = vld [vmem:[%s7 + $0x20] sm:$0xff]
  %v281 = vld [vmem:[%s7 + $0x28] sm:$0xff]
  %v282 = vld [vmem:[%s7 + $0x30] sm:$0xff]
  %v283 = vld [vmem:[%s7 + $0x38] sm:$0xff]
  %v284 = vld [vmem:[%s7 + $0x40] sm:$0xff]
  %v285 = vld [vmem:[%s7 + $0x48] sm:$0xff]
  %v286 = vld [vmem:[%s7 + $0x50] sm:$0xff]
  %v287 = vld [vmem:[%s7 + $0x58] sm:$0xff]
  %v288 = vld [vmem:[%s7 + $0x60] sm:$0xff]
  %v289 = vld [vmem:[%s7 + $0x68] sm:$0xff]
  %v290 = vld [vmem:[%s7 + $0x70] sm:$0xff]
  %v291 = vld [vmem:[%s7 + $0x78] sm:$0xff]
  %s292 = sld [smem:[#allocation2]]
  %v293 = vstv %s292
  %294 = vmatprep.subr.mxu0 0.0
  %295 = vmatpush1.msra.mxu0 %v276
  %296 = vmatprep.subr.mxu0 0.0
  %297 = vmatpush1.msra.mxu0 %v277
  %298 = vmatprep.subr.mxu0 0.0
  %299 = vmatpush1.msra.mxu0 %v278
  %300 = vmatprep.subr.mxu0 0.0
  %301 = vmatpush1.msra.mxu0 %v279
  %302 = vmatprep.subr.mxu0 0.0
  %303 = vmatpush1.msra.mxu0 %v280
  %304 = vmatprep.subr.mxu0 0.0
  %305 = vmatpush1.msra.mxu0 %v281
  %306 = vmatprep.subr.mxu0 0.0
  %307 = vmatpush1.msra.mxu0 %v282
  %308 = vmatprep.subr.mxu0 0.0
  %309 = vmatpush1.msra.mxu0 %v283
  %310 = vmatprep.subr.mxu0 0.0
  %311 = vmatpush1.msra.mxu0 %v284
  %312 = vmatprep.subr.mxu0 0.0
  %313 = vmatpush1.msra.mxu0 %v285
  %314 = vmatprep.subr.mxu0 0.0
  %315 = vmatpush1.msra.mxu0 %v286
  %316 = vmatprep.subr.mxu0 0.0
  %317 = vmatpush1.msra.mxu0 %v287
  %318 = vmatprep.subr.mxu0 0.0
  %319 = vmatpush1.msra.mxu0 %v288
  %320 = vmatprep.subr.mxu0 0.0
  %321 = vmatpush1.msra.mxu0 %v289
  %322 = vmatprep.subr.mxu0 0.0
  %323 = vmatpush1.msra.mxu0 %v290
  %324 = vmatprep.subr.mxu0 0.0
  %325 = vmatpush1.msra.mxu0 %v291
  %326 = vmatprep.subr.mxu0 0.0
  %327 = vmatpush1.msra.mxu0 0.0
  %328 = vmatprep.subr.mxu0 0.0
  %329 = vmatpush1.msra.mxu0 0.0
  %330 = vmatprep.subr.mxu0 0.0
  %331 = vmatpush1.msra.mxu0 0.0
  %332 = vmatprep.subr.mxu0 0.0
  %333 = vmatpush1.msra.mxu0 0.0
  %334 = vmatprep.subr.mxu0 0.0
  %335 = vmatpush1.msra.mxu0 0.0
  %336 = vmatprep.subr.mxu0 0.0
  %337 = vmatpush1.msra.mxu0 0.0
  %338 = vmatprep.subr.mxu0 0.0
  %339 = vmatpush1.msra.mxu0 0.0
  %340 = vmatprep.subr.mxu0 0.0
  %341 = vmatpush1.msra.mxu0 0.0
  %342 = vmatprep.subr.mxu0 0.0
  %343 = vmatpush1.msra.mxu0 0.0
  %344 = vmatprep.subr.mxu0 0.0
  %345 = vmatpush1.msra.mxu0 0.0
  %346 = vmatprep.subr.mxu0 0.0
  %347 = vmatpush1.msra.mxu0 0.0
  %348 = vmatprep.subr.mxu0 0.0
  %349 = vmatpush1.msra.mxu0 0.0
  %350 = vmatprep.subr.mxu0 0.0
  %351 = vmatpush1.msra.mxu0 0.0
  %352 = vmatprep.subr.mxu0 0.0
  %353 = vmatpush1.msra.mxu0 0.0
  %354 = vmatprep.subr.mxu0 0.0
  %355 = vmatpush1.msra.mxu0 0.0
  %356 = vmatprep.subr.mxu0 0.0
  %357 = vmatpush1.msra.mxu0 0.0
  %358 = vmatprep.mubr.f32.mxu0 0.0
  %359 = vmatmul.mubr.f32.gmra.mrb[0].mxu0 %v272
  %v360 = vpop.f32.mrb[0].mxu0
  %v361 = vadd.f32 %v293, %v360
  %v362 = vpop.f32.mrb[0].mxu0
  %363 = vmatprep.mubr.f32.mxu0 0.0
  %364 = vmatmul.mubr.f32.gmra.mrb[0].mxu0 %v273
  %v365 = vpop.f32.mrb[0].mxu0
  %v366 = vadd.f32 %v293, %v365
  %v367 = vpop.f32.mrb[0].mxu0
  %368 = vmatprep.mubr.f32.mxu0 0.0
  %369 = vmatmul.mubr.f32.gmra.mrb[0].mxu0 %v274
  %v370 = vpop.f32.mrb[0].mxu0
  %v371 = vadd.f32 %v293, %v370
  %v372 = vpop.f32.mrb[0].mxu0
  %373 = vmatprep.mubr.f32.mxu0 0.0
  %374 = vmatmul.mubr.f32.gmra.mrb[0].mxu0 %v275
  %v375 = vpop.f32.mrb[0].mxu0
  %v376 = vadd.f32 %v293, %v375
  %v377 = vpop.f32.mrb[0].mxu0
  %378 = vdwg.mxu0
  %v379 = vxor.u32 %v361, 2147483648
  %v380 = vxor.u32 %v366, 2147483648
  %v381 = vxor.u32 %v371, 2147483648
  %v382 = vxor.u32 %v376, 2147483648
  %v383 = vmul.f32 %v379, 1.442695
  %v384 = vpow.pop %v383
  %v385 = vmul.f32 %v380, 1.442695
  %v386 = vpow.pop %v385
  %v387 = vmul.f32 %v381, 1.442695
  %v388 = vpow.pop %v387
  %v389 = vmul.f32 %v382, 1.442695
  %v390 = vpow.pop %v389
  %v391 = vadd.f32 %v384, 1.0
  %v392 = vadd.f32 %v386, 1.0
  %v393 = vadd.f32 %v388, 1.0
  %v394 = vadd.f32 %v390, 1.0
  %v395 = vrcp.pop %v391
  %v396 = vmul.f32 1.0, %v395
  %v397 = vrcp.pop %v392
  %v398 = vmul.f32 1.0, %v397
  %v399 = vrcp.pop %v393
  %v400 = vmul.f32 1.0, %v399
  %v401 = vrcp.pop %v394
  %v402 = vmul.f32 1.0, %v401
  %vm403 = vcmask 31744
  %404 = vst.msk [vmem:[%s9] sm:$0xff] %vm403, %v396
  %405 = vst.msk [vmem:[%s9 + $0x8] sm:$0xff] %vm403, %v398
  %406 = vst.msk [vmem:[%s9 + $0x10] sm:$0xff] %vm403, %v400
  %407 = vst.msk [vmem:[%s9 + $0x18] sm:$0xff] %vm403, %v402
  // Predicated region
  $region38: #{jodie_link_predictor.1} parent=0 // pred_check
    _
  $region39: #{jodie_link_predictor.1} parent=0 // pred_check_branch
    %409 = sbr.rel (0) target = $region41
  $region40: #{jodie_link_predictor.1} parent=0 // pred_region
    _
  $region41: #{jodie_link_predictor.1} parent=0 // pred_fallthru
    _
  // Predicated region
  $region42: #{jodie_link_predictor.1} parent=0 // pred_check
    _
  $region43: #{jodie_link_predictor.1} parent=0 // pred_check_branch
    %411 = sbr.rel (0) target = $region45
  $region44: #{jodie_link_predictor.1} parent=0 // pred_region
    _
  $region45: #{jodie_link_predictor.1} parent=0 // pred_fallthru
    _

</llo_original>
